<compile_context>
chip_gen: v5e
topology: v5e:2x2
jax: 0.10.0
libtpu: 0.0.40
codegen_flags: <defaults>
</compile_context>

<pallas_src>
import math

import jax
import jax.numpy as jnp
from jax.experimental import pallas as pl
from jax.experimental.pallas import tpu as pltpu


_LANE = 128
_SUBLANE = 8
_TM_MAX = 512        # X-rows per pairwise tile   (multiple of 8)
_TN_MAX = 2048       # Y-rows per pairwise tile   (multiple of 128, lane-dense out)


def _round_up(v, m):
    return ((v + m - 1) // m) * m


def _round_down(v, m):
    return max(m, (v // m) * m)


def _pad2d(a, rows, cols):
    pr, pc = rows - a.shape[0], cols - a.shape[1]
    if pr or pc:
        a = jnp.pad(a, ((0, pr), (0, pc)))
    return a


def _vmem_limit_bytes():
    # v5e/v6e have 128 MiB physical VMEM, v7x only 64 MiB per TensorCore.
    # Size the scoped limit from the actual chip so one code path is safe
    # (and fast) on every generation.
    try:
        cap = int(pltpu.get_tpu_info().vmem_capacity_bytes)
    except Exception:
        cap = 64 << 20           # conservative fallback (v7x-sized)
    return max(32 << 20, min((cap * 3) // 4, 100 << 20))


def _pairwise_vmem_bytes(tm, tn, d_pad):
    # Double-buffered f32 blocks of the pairwise kernel: lhs, xx, yT, yy, out.
    return 2 * 4 * (tm * d_pad + tm + d_pad * tn + tn + tm * tn)


def _pick_pairwise_tiles(n, my, d_pad, budget):
    tm = min(_TM_MAX, _round_up(n, _SUBLANE))
    tn = min(_TN_MAX, _round_up(my, _LANE))
    # Shrink until the double-buffered tile set fits the VMEM budget
    # (matters for large D, and keeps v7x's 64 MiB VMEM safe).
    while _pairwise_vmem_bytes(tm, tn, d_pad) > budget:
        if tn > _LANE and tn >= tm:
            tn = _round_down(tn // 2, _LANE)
        elif tm > _SUBLANE:
            tm = _round_down(tm // 2, _SUBLANE)
        else:
            break
    return tm, tn


# -------------------- Pallas kernels --------------------

def _xm_xx_kernel(x_ref, m_ref, xm_ref, xx_ref):
    """XM = X @ M (stored in input dtype), xx = sum(XM * X, -1) in f32."""
    x = x_ref[...]
    xm = jnp.dot(x, m_ref[...], preferred_element_type=jnp.float32)
    xm_ref[...] = xm.astype(xm_ref.dtype)
    xx_ref[...] = jnp.sum(xm * x.astype(jnp.float32), axis=1, keepdims=True)


def _xx_identity_kernel(x_ref, xx_ref):
    """Identity-M fast path: xx = sum(X * X, -1) in f32 (no matmul, no M DMA)."""
    x = x_ref[...].astype(jnp.float32)
    xx_ref[...] = jnp.sum(x * x, axis=1, keepdims=True)


def _yy_kernel(mt_ref, yt_ref, yy_ref):
    """yy = sum((Y @ M) * Y, -1), computed from yT/mT as a lane-dense row."""
    yt = yt_ref[...]
    ymt = jnp.dot(mt_ref[...], yt, preferred_element_type=jnp.float32)
    yy_ref[...] = jnp.sum(ymt * yt.astype(jnp.float32), axis=0, keepdims=True)


def _yy_identity_kernel(yt_ref, yy_ref):
    """Identity-M fast path: yy = sum(Y * Y, -1) as a lane-dense row."""
    yt = yt_ref[...].astype(jnp.float32)
    yy_ref[...] = jnp.sum(yt * yt, axis=0, keepdims=True)


def _dnorm2_tile_kernel(lhs_ref, xx_ref, yt_ref, yy_ref, d_ref):
    """dnorm2[i,j] = xx_i + yy_j - 2 * (LHS_i . Y_j); canonical (tm,K)x(K,tn)."""
    xy = jnp.dot(lhs_ref[...], yt_ref[...], preferred_element_type=jnp.float32)
    d_ref[...] = xx_ref[...] + yy_ref[...] - 2.0 * xy


def _rbf_fused_kernel(gamma_ref, lhs_ref, xx_ref, yt_ref, yy_ref, k_ref):
    """K = exp(-gamma * dnorm2), dnorm2 recomputed per tile, gamma in SMEM."""
    xy = jnp.dot(lhs_ref[...], yt_ref[...], preferred_element_type=jnp.float32)
    d = xx_ref[...] + yy_ref[...] - 2.0 * xy
    k_ref[...] = jnp.exp(-gamma_ref[0] * d).astype(k_ref.dtype)


# -------------------- pallas_call wrappers --------------------

def _prep_x(xp, mp, tile, vmem_limit):
    """Returns (lhs, xx): lhs = X@M (or X itself when M is None), xx column."""
    n_pad, d_pad = xp.shape
    params = pltpu.CompilerParams(dimension_semantics=("parallel",),
                                  vmem_limit_bytes=vmem_limit)
    if mp is None:
        xx = pl.pallas_call(
            _xx_identity_kernel,
            out_shape=jax.ShapeDtypeStruct((n_pad, 1), jnp.float32),
            grid=(n_pad // tile,),
            in_specs=[pl.BlockSpec((tile, d_pad), lambda i: (i, 0))],
            out_specs=pl.BlockSpec((tile, 1), lambda i: (i, 0)),
            compiler_params=params,
        )(xp)
        return xp, xx
    # TODO(synk): for very large D the (d_pad, d_pad) M block is double-
    # buffered even though its index_map is constant; a k-tiled contraction
    # (or single-buffering of M) would be needed for D >~ 2048 on v7x.
    xm, xx = pl.pallas_call(
        _xm_xx_kernel,
        out_shape=(jax.ShapeDtypeStruct((n_pad, d_pad), xp.dtype),
                   jax.ShapeDtypeStruct((n_pad, 1), jnp.float32)),
        grid=(n_pad // tile,),
        in_specs=[pl.BlockSpec((tile, d_pad), lambda i: (i, 0)),
                  pl.BlockSpec((d_pad, d_pad), lambda i: (0, 0))],
        out_specs=(pl.BlockSpec((tile, d_pad), lambda i: (i, 0)),
                   pl.BlockSpec((tile, 1), lambda i: (i, 0))),
        compiler_params=params,
    )(xp, mp)
    return xm, xx


def _prep_yy(ytp, mtp, tile, vmem_limit):
    """yy as a lane-dense (1, my_pad) row, from yT (and mT when M is given)."""
    d_pad, my_pad = ytp.shape
    params = pltpu.CompilerParams(dimension_semantics=("parallel",),
                                  vmem_limit_bytes=vmem_limit)
    if mtp is None:
        return pl.pallas_call(
            _yy_identity_kernel,
            out_shape=jax.ShapeDtypeStruct((1, my_pad), jnp.float32),
            grid=(my_pad // tile,),
            in_specs=[pl.BlockSpec((d_pad, tile), lambda j: (0, j))],
            out_specs=pl.BlockSpec((1, tile), lambda j: (0, j)),
            compiler_params=params,
        )(ytp)
    return pl.pallas_call(
        _yy_kernel,
        out_shape=jax.ShapeDtypeStruct((1, my_pad), jnp.float32),
        grid=(my_pad // tile,),
        in_specs=[pl.BlockSpec((d_pad, d_pad), lambda j: (0, 0)),
                  pl.BlockSpec((d_pad, tile), lambda j: (0, j))],
        out_specs=pl.BlockSpec((1, tile), lambda j: (0, j)),
        compiler_params=params,
    )(mtp, ytp)


def _dnorm2_tiled(lhs, xx, ytp, yy, tm, tn, vmem_limit):
    n_pad, d_pad = lhs.shape
    my_pad = ytp.shape[1]
    cost = pl.CostEstimate(
        flops=2 * n_pad * my_pad * d_pad,
        transcendentals=0,
        bytes_accessed=4 * (n_pad * d_pad + (n_pad // tm) * my_pad * d_pad
                            + n_pad + my_pad + n_pad * my_pad))
    return pl.pallas_call(
        _dnorm2_tile_kernel,
        out_shape=jax.ShapeDtypeStruct((n_pad, my_pad), jnp.float32),
        grid=(n_pad // tm, my_pad // tn),
        in_specs=[pl.BlockSpec((tm, d_pad), lambda i, j: (i, 0)),
                  pl.BlockSpec((tm, 1), lambda i, j: (i, 0)),
                  pl.BlockSpec((d_pad, tn), lambda i, j: (0, j)),
                  pl.BlockSpec((1, tn), lambda i, j: (0, j))],
        out_specs=pl.BlockSpec((tm, tn), lambda i, j: (i, j)),
        compiler_params=pltpu.CompilerParams(
            dimension_semantics=("parallel", "parallel"),
            vmem_limit_bytes=vmem_limit),
        cost_estimate=cost,
    )(lhs, xx, ytp, yy)


def _rbf_fused_tiled(gamma, lhs, xx, ytp, yy, tm, tn, out_dtype, vmem_limit):
    n_pad, d_pad = lhs.shape
    my_pad = ytp.shape[1]
    cost = pl.CostEstimate(
        flops=2 * n_pad * my_pad * d_pad,
        transcendentals=n_pad * my_pad,
        bytes_accessed=4 * (n_pad * d_pad + (n_pad // tm) * my_pad * d_pad
                            + n_pad + my_pad + n_pad * my_pad))
    gamma_arr = jnp.asarray(gamma, jnp.float32).reshape(1)
    return pl.pallas_call(
        _rbf_fused_kernel,
        out_shape=jax.ShapeDtypeStruct((n_pad, my_pad), out_dtype),
        grid=(n_pad // tm, my_pad // tn),
        in_specs=[pl.BlockSpec(memory_space=pltpu.MemorySpace.SMEM),
                  pl.BlockSpec((tm, d_pad), lambda i, j: (i, 0)),
                  pl.BlockSpec((tm, 1), lambda i, j: (i, 0)),
                  pl.BlockSpec((d_pad, tn), lambda i, j: (0, j)),
                  pl.BlockSpec((1, tn), lambda i, j: (0, j))],
        out_specs=pl.BlockSpec((tm, tn), lambda i, j: (i, j)),
        compiler_params=pltpu.CompilerParams(
            dimension_semantics=("parallel", "parallel"),
            vmem_limit_bytes=vmem_limit),
        cost_estimate=cost,
    )(gamma_arr, lhs, xx, ytp, yy)


# -------------------- module --------------------

def _median_torch_style(x):
    """Matches RBF.median: flatten, sort, mean of the two middle elems if even."""
    flat = jnp.sort(x.reshape(-1))
    length = flat.shape[0]
    if length % 2 == 0:
        szh = length // 2
        return (flat[szh - 1] + flat[szh]) * 0.5
    return flat[(length - 1) // 2]


class RBF:
    def __init__(self, sigma=None):
        self.sigma = sigma

    def __call__(self, X, Y, M=None):
        n, d = X.shape
        my = Y.shape[0]
        d_pad = _round_up(d, _LANE)

        vmem_limit = _vmem_limit_bytes()
        budget = (vmem_limit * 7) // 10
        tm, tn = _pick_pairwise_tiles(n, my, d_pad, budget)
        n_pad = _round_up(n, tm)
        my_pad = _round_up(my, tn)

        xp = _pad2d(X, n_pad, d_pad)
        # One-time wrapper transpose of Y -> canonical (K, tn) RHS blocks,
        # removing the per-tile in-kernel transpose on the hot path.
        ytp = _pad2d(Y.T, d_pad, my_pad)

        if M is None:
            mp = mtp = None                      # identity-M fast path
        else:
            m = M.astype(X.dtype)
            mp = _pad2d(m, d_pad, d_pad)
            mtp = _pad2d(m.T, d_pad, d_pad)

        lhs, xx = _prep_x(xp, mp, tm, vmem_limit)     # Pallas: (X@M or X), xx
        yy = _prep_yy(ytp, mtp, tn, vmem_limit)       # Pallas: lane-dense yy

        if self.sigma is None:
            # TODO(synk): the median needs a global sort, which has no clean
            # Pallas TPU equivalent; it runs in plain JAX on the (n, my)
            # distance matrix produced by the tiled Pallas kernel.
            dn = _dnorm2_tiled(lhs, xx, ytp, yy, tm, tn, vmem_limit)
            med = _median_torch_style(jax.lax.stop_gradient(dn[:n, :my]))
            sigma = med / (2.0 * math.log(n + 1))
        else:
            sigma = self.sigma ** 2
        gamma = 1.0 / (2.0 * sigma)

        k = _rbf_fused_tiled(gamma, lhs, xx, ytp, yy, tm, tn, X.dtype,
                             vmem_limit)
        return k[:n, :my]


# -------------------- reference (plain JAX) --------------------

def _rbf_reference(X, Y, sigma=None, M=None):
    if M is None:
        M = jnp.eye(X.shape[1], dtype=X.dtype)
    XM = X @ M
    XX = jnp.sum(XM * X, axis=1, keepdims=True)
    YY = jnp.sum((Y @ M) * Y, axis=1, keepdims=True).T
    XY = XM @ Y.T
    dnorm2 = XX + YY - 2.0 * XY
    if sigma is None:
        s = _median_torch_style(dnorm2) / (2.0 * math.log(X.shape[0] + 1))
    else:
        s = sigma ** 2
    gamma = 1.0 / (2.0 * s)
    return jnp.exp(-gamma * dnorm2)


if __name__ == "__main__":
    key = jax.random.PRNGKey(0)
    kx, ky, kx2, ky2, km = jax.random.split(key, 5)

    # Small demo shapes consistent with the module (particles x features).
    N, My, D = 8, 8, 32
    X = jax.random.normal(kx, (N, D), dtype=jnp.float32)
    Y = jax.random.normal(ky, (My, D), dtype=jnp.float32)

    # Median-heuristic bandwidth (PyTorch default), identity-M fast path.
    rbf = RBF(sigma=None)
    K = jax.block_until_ready(rbf(X, Y))
    K_ref = _rbf_reference(X, Y, sigma=None)
    assert K.shape == (N, My), K.shape
    assert jnp.allclose(K, K_ref, atol=1e-4, rtol=1e-4), (
        float(jnp.max(jnp.abs(K - K_ref))))

    # Fixed-sigma path (fully fused single pairwise Pallas pass).
    rbf2 = RBF(sigma=1.5)
    K2 = jax.block_until_ready(rbf2(X, Y))
    K2_ref = _rbf_reference(X, Y, sigma=1.5)
    assert jnp.allclose(K2, K2_ref, atol=1e-4, rtol=1e-4)

    # Non-square, padded case (exercises row/lane padding + slicing).
    N3, My3, D3 = 40, 200, 48
    X3 = jax.random.normal(kx2, (N3, D3), dtype=jnp.float32)
    Y3 = jax.random.normal(ky2, (My3, D3), dtype=jnp.float32)
    K3 = jax.block_until_ready(RBF(sigma=None)(X3, Y3))
    K3_ref = _rbf_reference(X3, Y3, sigma=None)
    assert K3.shape == (N3, My3), K3.shape
    assert jnp.allclose(K3, K3_ref, atol=1e-4, rtol=1e-4), (
        float(jnp.max(jnp.abs(K3 - K3_ref))))

    # Explicit (non-identity) M path: exercises the X@M / yy-from-yT kernels.
    A = jax.random.normal(km, (D, D), dtype=jnp.float32)
    M4 = A @ A.T / D + jnp.eye(D, dtype=jnp.float32)
    K4 = jax.block_until_ready(RBF(sigma=2.0)(X, Y, M4))
    K4_ref = _rbf_reference(X, Y, sigma=2.0, M=M4)
    assert jnp.allclose(K4, K4_ref, atol=1e-4, rtol=1e-4), (
        float(jnp.max(jnp.abs(K4 - K4_ref))))

    print("KERNEL_OK")
</pallas_src>

<mosaic_0001>
module attributes {stable_mosaic.version = 11 : i64} {
  func.func @_xx_identity_kernel(%arg0: i32, %arg1: memref<8x128xf32, #tpu.memory_space<vmem>>, %arg2: memref<8x1xf32, #tpu.memory_space<vmem>>) attributes {dimension_semantics = [#tpu.dimension_semantics<parallel>], iteration_bounds = array<i64: 1>, scalar_prefetch = 0 : i64, scratch_operands = 0 : i64, tpu.core_type = #tpu.core_type<tc>, window_params = [{transform_indices = @transform_0, window_bounds = array<i64: 8, 128>}, {transform_indices = @transform_1, window_bounds = array<i64: 8, 1>}]} {
    %c0 = arith.constant 0 : index
    %c0_0 = arith.constant 0 : index
    %0 = vector.load %arg1[%c0, %c0_0] : memref<8x128xf32, #tpu.memory_space<vmem>>, vector<8x128xf32>
    %1 = arith.mulf %0, %0 : vector<8x128xf32>
    %cst = arith.constant dense<0.000000e+00> : vector<8xf32>
    %2 = vector.multi_reduction <add>, %1, %cst [1] : vector<8x128xf32> to vector<8xf32>
    %3 = vector.shape_cast %2 : vector<8xf32> to vector<8x1xf32>
    %c0_1 = arith.constant 0 : index
    %c0_2 = arith.constant 0 : index
    %4 = vector.load %arg2[%c0_1, %c0_2] : memref<8x1xf32, #tpu.memory_space<vmem>>, vector<8x1xf32>
    tpu.vector_store %arg2[%c0_1, %c0_2], %3 {strides = array<i32>} : memref<8x1xf32, #tpu.memory_space<vmem>>, vector<8x1xf32>,
    return
  }
  func.func @transform_0(%arg0: i32) -> (i32, i32) {
    %c0_i32 = arith.constant 0 : i32
    %c0_i32_0 = arith.constant 0 : i32
    return %arg0, %c0_i32 : i32, i32
  }
  func.func @transform_1(%arg0: i32) -> (i32, i32) {
    %c0_i32 = arith.constant 0 : i32
    %c0_i32_0 = arith.constant 0 : i32
    return %arg0, %c0_i32 : i32, i32
  }
}

</mosaic_0001>

<llo_original>
// kernel: tpu_custom_call.1
$region0: #{tpu_custom_call.1}
  #allocation0 [shape = 'u32[]', space=smem, size = 0x4, offset = 0x4, fixed_abs, tag = 'smem constant byte address 0x4 - core index']
  #allocation1 [shape = 'u32[72,128]{1,0:T(1,128)}', space=vmem, size = 0x9000, scoped, tag = 'internal scratch']
  %s0 = inlined_call_operand.hbm [shape: f32[8,128], index: 0, kind: input, shape index: {}]
  %s1 = inlined_call_operand.vmem [shape: f32[8,1], index: 1, kind: output, shape index: {}]
  %s2 = sld [smem:[#allocation0]]
  $region18: #{tpu_custom_call.1} parent=0
    _
  %s4 = ssub.s32 1, %s2
  %s5 = scalar_select 0, %s4, %s2
  $region1: #{tpu_custom_call.1} parent=0
    #allocation2 [shape = 'u8[4096]{0}', space=vmem, size = 0x1000, scoped, tag = 'input window, operand 0, single buffered']
    #allocation3 [shape = 's32[1]{0}', space=sflag, size = 0x4, scoped, tag = 'scoped memory for tpu_custom_call.1']
    %6 = vsyncpa [#allocation3], 0
    // Predicated region
    $region2: #{tpu_custom_call.1} parent=1 // pred_check
      _
    $region3: #{tpu_custom_call.1} parent=1 // pred_check_branch
      %8 = sbr.rel (0) target = $region5
    $region4: #{tpu_custom_call.1} parent=1 // pred_region
      %10 = vsyncadd [#allocation3], 0
      %s12 = sshll.u32 %s0, 4
      %s13 = int_to_ptr.hbm [resolvable:$true] %s12
      %s14 = sshll.u32 [#allocation2], 4
      %s15 = int_to_ptr.vmem [resolvable:$true] %s14
      %17 = dma.hbm_to_vmem [thread:$0]  %s13, 128, %s15, [#allocation3]
    $region5: #{tpu_custom_call.1} parent=1 // pred_fallthru
      _
    // Predicated region
    $region6: #{tpu_custom_call.1} parent=1 // pred_check
      _
    $region7: #{tpu_custom_call.1} parent=1 // pred_check_branch
      %19 = sbr.rel (0) target = $region9
    $region8: #{tpu_custom_call.1} parent=1 // pred_region
      %21 = dma.done [#allocation3], 128
    $region9: #{tpu_custom_call.1} parent=1 // pred_fallthru
      _
    %v22 = vld [vmem:[#allocation2] sm:$0xff]
    %v23 = vmul.f32 %v22, %v22
    %24 = vadd.xlane.f32.xlu0 %v23
    %v25 = vpop.xlane.xlu0 %24
    %vm26 = vcmask 7168
    %27 = vst.msk [vmem:[%s1] sm:$0xff] %vm26, %v25
    // Predicated region
    $region10: #{tpu_custom_call.1} parent=1 // pred_check
      _
    $region11: #{tpu_custom_call.1} parent=1 // pred_check_branch
      %29 = sbr.rel (0) target = $region13
    $region12: #{tpu_custom_call.1} parent=1 // pred_region
      _
    $region13: #{tpu_custom_call.1} parent=1 // pred_fallthru
      _
    // Predicated region
    $region14: #{tpu_custom_call.1} parent=1 // pred_check
      _
    $region15: #{tpu_custom_call.1} parent=1 // pred_check_branch
      %31 = sbr.rel (0) target = $region17
    $region16: #{tpu_custom_call.1} parent=1 // pred_region
      _
    $region17: #{tpu_custom_call.1} parent=1 // pred_fallthru
      _
    %32 = vsyncpa [#allocation3], 1

</llo_original>
